<compile_context>
chip_gen: v5e
topology: v5e:2x2
jax: 0.10.0
libtpu: 0.0.40
codegen_flags: <defaults>
</compile_context>

<pallas_src>
import functools

import jax
import jax.numpy as jnp
from jax.experimental import pallas as pl
from jax.experimental.pallas import tpu as pltpu


def _round_up(a, b):
    return (a + b - 1) // b * b


def _double_conv_kernel(x_ref, w1_ref, b1_ref, w2_ref, b2_ref, out_ref,
                        xf_ref, mf_ref, col1_ref, col2_ref, *,
                        H, W, B, cin, cout1, cout2, cp1, cp2, lpad, flat_len,
                        cast_cols_to):
    """Processes B images per grid step.

    x_ref   : (B, cin,  H*W)            flattened NCHW images (lane axis = H*W)
    w1_ref  : (cout1, 9*cp1)            stage-1 weights (BN folded), K = (kh, kw, c_pad)
    b1_ref  : (cout1, 1)                stage-1 folded bias (f32)
    w2_ref  : (cout2, 9*cp2)            stage-2 weights
    b2_ref  : (cout2, 1)                stage-2 folded bias (f32)
    out_ref : (B, cout2, H*W)           flattened NCHW outputs
    xf_ref  : (B, cp1, flat_len) f32    zero-haloed, channel-padded input scratch
    mf_ref  : (B, cp2, flat_len) f32    zero-haloed, channel-padded stage-1 activation
    col1_ref: (9*cp1, B*H*W)            im2col scratch, stage 1 (fully overwritten each step)
    col2_ref: (9*cp2, B*H*W)            im2col scratch, stage 2 (fully overwritten each step)
    """
    HW = H * W
    rpad = flat_len - lpad - HW

    # Column-border masks (hoisted; broadcast ONCE per stage inside build_cols).
    wpos = jax.lax.broadcasted_iota(jnp.int32, (1, HW), 1) % W
    mask_l = wpos >= 1          # valid positions for a dw = -1 tap
    mask_r = wpos <= (W - 2)    # valid positions for a dw = +1 tap

    def refresh_halo(dst_ref, c, cp):
        # Re-zero ONLY the halo columns and channel-pad rows (~few KB).  Must run every
        # step: with the "parallel" batch axis each v7x TensorCore has its own scratch and
        # its first iteration is not program_id==0, so an init-once pattern would read
        # stale VMEM on the second core.
        for b in range(B):
            dst_ref[b, :, 0:lpad] = jnp.zeros((cp, lpad), jnp.float32)
            dst_ref[b, :, lpad + HW:flat_len] = jnp.zeros((cp, rpad), jnp.float32)
            if cp > c:
                dst_ref[b, c:cp, lpad:lpad + HW] = jnp.zeros((cp - c, HW), jnp.float32)

    def build_cols(src_ref, cp, col_ref, center_override=None):
        # Fill the (9*cp, B*HW) im2col matrix from 9 static lane-offset slices per image.
        # Every row/column of col_ref is written, so it never needs zero-initialisation
        # (the channel-pad zeros ride along from the haloed scratch's zero rows).
        ml = jnp.broadcast_to(mask_l, (cp, HW))   # one broadcast per stage, reused by 3 taps
        mr = jnp.broadcast_to(mask_r, (cp, HW))
        t = 0
        for dh in (-1, 0, 1):
            for dw in (-1, 0, 1):
                start = lpad + dh * W + dw
                for b in range(B):
                    if dh == 0 and dw == 0 and center_override is not None:
                        tap = center_override[:, b * HW:(b + 1) * HW]   # still in vregs
                    else:
                        tap = src_ref[b, :, start:start + HW]           # (cp, HW)
                        if dw == -1:
                            tap = jnp.where(ml, tap, 0.0)
                        elif dw == 1:
                            tap = jnp.where(mr, tap, 0.0)
                    col_ref[t * cp:(t + 1) * cp, b * HW:(b + 1) * HW] = tap
                t += 1

    def matmul_bias_relu(w_ref, col_ref, b_ref):
        col = col_ref[...]
        if cast_cols_to is not None:
            col = col.astype(cast_cols_to)          # bf16 MXU operands (v6e/v7x native)
        y = jnp.dot(w_ref[...], col, preferred_element_type=jnp.float32)
        return jnp.maximum(y + b_ref[...], 0.0)     # f32 VPU epilogue (v5e-friendly)

    # ---- stage 1: conv3x3 + folded BN + ReLU ----
    refresh_halo(xf_ref, cin, cp1)
    for b in range(B):
        xf_ref[b, 0:cin, lpad:lpad + HW] = x_ref[b].astype(jnp.float32)
    build_cols(xf_ref, cp1, col1_ref)
    y1 = matmul_bias_relu(w1_ref, col1_ref, b1_ref)             # (cout1, B*HW) f32

    # ---- stage 2: conv3x3 + folded BN + ReLU (stage-1 activation never leaves VMEM) ----
    refresh_halo(mf_ref, cout1, cp2)
    for b in range(B):
        mf_ref[b, 0:cout1, lpad:lpad + HW] = y1[:, b * HW:(b + 1) * HW]
    center2 = y1 if cout1 == cp2 else None          # reuse vregs for the dh=dw=0 tap
    build_cols(mf_ref, cp2, col2_ref, center_override=center2)
    y2 = matmul_bias_relu(w2_ref, col2_ref, b2_ref)             # (cout2, B*HW) f32

    for b in range(B):
        out_ref[b] = y2[:, b * HW:(b + 1) * HW].astype(out_ref.dtype)


def _fold_conv_bn(w_oihw, conv_b, gamma, beta, mean, var, cp, eps, w_dtype):
    """Fold eval-mode BN (and the conv bias) into weights/bias; pack weights as (O, 9*cp)."""
    O, I, KH, KW = w_oihw.shape
    scale = gamma / jnp.sqrt(var + eps)                         # (O,)
    bias = scale * (conv_b - mean) + beta                       # (O,)
    wf = w_oihw * scale[:, None, None, None]                    # fold BN scale into weights
    w_t = jnp.transpose(wf, (0, 2, 3, 1))                       # (O, KH, KW, I)
    w_t = jnp.pad(w_t, ((0, 0), (0, 0), (0, 0), (0, cp - I)))   # zero-pad channels to cp
    w_mat = jnp.reshape(w_t, (O, KH * KW * cp)).astype(w_dtype)
    return w_mat, bias.reshape(O, 1).astype(jnp.float32)


def _pick_b_tile(n, per_image_col_bytes, budget_bytes=4 << 20):
    """Largest divisor of n that keeps >=2 grid steps (one per v7x TensorCore) and keeps the
    im2col scratches within a conservative VMEM budget."""
    best = 1
    for bt in range(1, n + 1):
        if n % bt:
            continue
        if n >= 2 and n // bt < 2:
            continue
        if bt * per_image_col_bytes > budget_bytes:
            continue
        best = bt
    return best


def double_conv2_forward(x_nchw, params, eps=1e-5, use_bf16_matmul=False):
    """Pallas implementation of DoubleConv2.forward (eval mode).  x_nchw: (N, Cin, H, W)."""
    (w1, b1, g1, be1, m1, v1, w2, b2, g2, be2, m2, v2) = params
    N, cin, H, W = x_nchw.shape
    cout1 = w1.shape[0]
    cout2 = w2.shape[0]
    HW = H * W
    cp1 = _round_up(cin, 8)
    cp2 = _round_up(cout1, 8)
    lpad = _round_up(W + 1, 128)                      # lane-aligned interior start
    flat_len = lpad + _round_up(HW + W + 1, 128)      # 128-multiple scratch width

    w_dtype = jnp.bfloat16 if use_bf16_matmul else jnp.float32
    cast_cols_to = jnp.bfloat16 if use_bf16_matmul else None
    w1m, b1v = _fold_conv_bn(w1, b1, g1, be1, m1, v1, cp1, eps, w_dtype)
    w2m, b2v = _fold_conv_bn(w2, b2, g2, be2, m2, v2, cp2, eps, w_dtype)

    per_image_col_bytes = 4 * HW * 9 * (cp1 + cp2)    # col scratches stay f32
    b_tile = _pick_b_tile(N, per_image_col_bytes)
    grid_n = N // b_tile

    x_flat = x_nchw.reshape(N, cin, HW)               # free contiguous reshape (still NCHW)

    kernel = functools.partial(
        _double_conv_kernel, H=H, W=W, B=b_tile, cin=cin, cout1=cout1, cout2=cout2,
        cp1=cp1, cp2=cp2, lpad=lpad, flat_len=flat_len, cast_cols_to=cast_cols_to)

    wbytes = 2 if use_bf16_matmul else 4
    cost = pl.CostEstimate(
        flops=2 * N * HW * (9 * cp1 * cout1 + 9 * cp2 * cout2),
        transcendentals=0,
        bytes_accessed=(x_flat.size * 4 + (w1m.size + w2m.size) * wbytes
                        + (b1v.size + b2v.size) * 4 + N * cout2 * HW * 4))

    out_flat = pl.pallas_call(
        kernel,
        out_shape=jax.ShapeDtypeStruct((N, cout2, HW), x_nchw.dtype),
        grid_spec=pltpu.PrefetchScalarGridSpec(
            num_scalar_prefetch=0,
            grid=(grid_n,),
            in_specs=[
                pl.BlockSpec((b_tile, cin, HW), lambda n: (n, 0, 0)),
                pl.BlockSpec((cout1, 9 * cp1), lambda n: (0, 0)),
                pl.BlockSpec((cout1, 1), lambda n: (0, 0)),
                pl.BlockSpec((cout2, 9 * cp2), lambda n: (0, 0)),
                pl.BlockSpec((cout2, 1), lambda n: (0, 0)),
            ],
            out_specs=pl.BlockSpec((b_tile, cout2, HW), lambda n: (n, 0, 0)),
            scratch_shapes=[
                pltpu.VMEM((b_tile, cp1, flat_len), jnp.float32),
                pltpu.VMEM((b_tile, cp2, flat_len), jnp.float32),
                pltpu.VMEM((9 * cp1, b_tile * HW), jnp.float32),
                pltpu.VMEM((9 * cp2, b_tile * HW), jnp.float32),
            ]),
        compiler_params=pltpu.CompilerParams(dimension_semantics=("parallel",)),
        cost_estimate=cost,
    )(x_flat, w1m, b1v, w2m, b2v)

    return out_flat.reshape(N, cout2, H, W)


# ------------------------- pure-JAX reference (for checking) -------------------------
def _ref_stage(x, w_oihw, b, gamma, beta, mean, var, eps=1e-5):
    y = jax.lax.conv_general_dilated(
        x, w_oihw, window_strides=(1, 1), padding=((1, 1), (1, 1)),
        dimension_numbers=("NCHW", "OIHW", "NCHW"))
    y = y + b[None, :, None, None]
    y = (gamma[None, :, None, None] * (y - mean[None, :, None, None])
         / jnp.sqrt(var[None, :, None, None] + eps) + beta[None, :, None, None])
    return jnp.maximum(y, 0.0)


def double_conv2_ref(x_nchw, params):
    (w1, b1, g1, be1, m1, v1, w2, b2, g2, be2, m2, v2) = params
    x = _ref_stage(x_nchw, w1, b1, g1, be1, m1, v1)
    x = _ref_stage(x, w2, b2, g2, be2, m2, v2)
    return x


if __name__ == "__main__":
    key = jax.random.PRNGKey(0)
    N, in_ch, out_ch, H, W = 2, 4, 8, 16, 16

    ks = jax.random.split(key, 16)
    x = jax.random.normal(ks[0], (N, in_ch, H, W), dtype=jnp.float32)

    # Synthetic parameters; conv weights in PyTorch OIHW layout (Cout, Cin, 3, 3).
    w1 = jax.random.normal(ks[1], (out_ch, in_ch, 3, 3), jnp.float32) * 0.1
    b1 = jax.random.normal(ks[2], (out_ch,), jnp.float32) * 0.1
    g1 = 1.0 + 0.1 * jax.random.normal(ks[3], (out_ch,), jnp.float32)
    be1 = 0.1 * jax.random.normal(ks[4], (out_ch,), jnp.float32)
    m1 = 0.1 * jax.random.normal(ks[5], (out_ch,), jnp.float32)
    v1 = 1.0 + 0.1 * jnp.abs(jax.random.normal(ks[6], (out_ch,), jnp.float32))

    w2 = jax.random.normal(ks[7], (out_ch, out_ch, 3, 3), jnp.float32) * 0.1
    b2 = jax.random.normal(ks[8], (out_ch,), jnp.float32) * 0.1
    g2 = 1.0 + 0.1 * jax.random.normal(ks[9], (out_ch,), jnp.float32)
    be2 = 0.1 * jax.random.normal(ks[10], (out_ch,), jnp.float32)
    m2 = 0.1 * jax.random.normal(ks[11], (out_ch,), jnp.float32)
    v2 = 1.0 + 0.1 * jnp.abs(jax.random.normal(ks[12], (out_ch,), jnp.float32))

    params = (w1, b1, g1, be1, m1, v1, w2, b2, g2, be2, m2, v2)

    ref = jax.block_until_ready(double_conv2_ref(x, params))

    # f32 path (exact-precision check).
    fwd = jax.jit(functools.partial(double_conv2_forward, use_bf16_matmul=False))
    out = jax.block_until_ready(fwd(x, params))
    assert out.shape == (N, out_ch, H, W), out.shape
    assert jnp.allclose(out, ref, atol=1e-4, rtol=1e-4), float(jnp.max(jnp.abs(out - ref)))

    # bf16-MXU path (v6e/v7x native bf16 MXU; f32 accumulate + f32 epilogue) — looser tol.
    fwd_bf16 = jax.jit(functools.partial(double_conv2_forward, use_bf16_matmul=True))
    out_bf16 = jax.block_until_ready(fwd_bf16(x, params))
    assert jnp.allclose(out_bf16, ref, atol=5e-2, rtol=5e-2), \
        float(jnp.max(jnp.abs(out_bf16 - ref)))

    print("KERNEL_OK")
</pallas_src>

<mosaic_0001>
module attributes {stable_mosaic.version = 11 : i64} {
  func.func @_double_conv_kernel(%arg0: i32, %arg1: memref<1x4x256xf32, #tpu.memory_space<vmem>>, %arg2: memref<8x72xf32, #tpu.memory_space<vmem>>, %arg3: memref<8x1xf32, #tpu.memory_space<vmem>>, %arg4: memref<8x72xf32, #tpu.memory_space<vmem>>, %arg5: memref<8x1xf32, #tpu.memory_space<vmem>>, %arg6: memref<1x8x256xf32, #tpu.memory_space<vmem>>, %arg7: memref<1x8x512xf32, #tpu.memory_space<vmem>>, %arg8: memref<1x8x512xf32, #tpu.memory_space<vmem>>, %arg9: memref<72x256xf32, #tpu.memory_space<vmem>>, %arg10: memref<72x256xf32, #tpu.memory_space<vmem>>) attributes {dimension_semantics = [#tpu.dimension_semantics<parallel>], iteration_bounds = array<i64: 2>, scalar_prefetch = 0 : i64, scratch_operands = 4 : i64, tpu.core_type = #tpu.core_type<tc>, window_params = [{transform_indices = @transform_0, window_bounds = array<i64: 1, 4, 256>}, {pipeline_mode = #tpu.pipeline_mode<synchronous>, transform_indices = @transform_1, window_bounds = array<i64: 8, 72>}, {pipeline_mode = #tpu.pipeline_mode<synchronous>, transform_indices = @transform_2, window_bounds = array<i64: 8, 1>}, {pipeline_mode = #tpu.pipeline_mode<synchronous>, transform_indices = @transform_3, window_bounds = array<i64: 8, 72>}, {pipeline_mode = #tpu.pipeline_mode<synchronous>, transform_indices = @transform_4, window_bounds = array<i64: 8, 1>}, {transform_indices = @transform_5, window_bounds = array<i64: 1, 8, 256>}]} {
    %0 = tpu.iota {dimensions = array<i32: 1>} : vector<1x256xi32>
    %c16_i32 = arith.constant 16 : i32
    %c0_i32 = arith.constant 0 : i32
    %1 = arith.cmpi eq, %c16_i32, %c0_i32 : i32
    %c1_i32 = arith.constant 1 : i32
    %2 = arith.select %1, %c1_i32, %c16_i32 : i32
    %3 = vector.broadcast %2 : i32 to vector<1x256xi32>
    %4 = arith.remsi %0, %3 : vector<1x256xi32>
    %c0_i32_0 = arith.constant 0 : i32
    %5 = vector.broadcast %c0_i32_0 : i32 to vector<1x256xi32>
    %6 = arith.cmpi ne, %4, %5 : vector<1x256xi32>
    %c0_i32_1 = arith.constant 0 : i32
    %7 = vector.broadcast %c0_i32_1 : i32 to vector<1x256xi32>
    %8 = arith.cmpi slt, %4, %7 : vector<1x256xi32>
    %c0_i32_2 = arith.constant 0 : i32
    %9 = arith.cmpi slt, %2, %c0_i32_2 : i32
    %10 = vector.broadcast %9 : i1 to vector<1x256xi1>
    %11 = vector.broadcast %10 : vector<1x256xi1> to vector<1x256xi1>
    %12 = arith.xori %8, %11 : vector<1x256xi1>
    %13 = arith.andi %12, %6 : vector<1x256xi1>
    %14 = vector.broadcast %2 : i32 to vector<1x256xi32>
    %15 = arith.addi %4, %14 : vector<1x256xi32>
    %16 = arith.select %13, %15, %4 : vector<1x256xi1>, vector<1x256xi32>
    %c1_i32_3 = arith.constant 1 : i32
    %17 = vector.broadcast %c1_i32_3 : i32 to vector<1x256xi32>
    %18 = arith.cmpi sge, %16, %17 : vector<1x256xi32>
    %c14_i32 = arith.constant 14 : i32
    %19 = vector.broadcast %c14_i32 : i32 to vector<1x256xi32>
    %20 = arith.cmpi sle, %16, %19 : vector<1x256xi32>
    %cst = arith.constant 0.000000e+00 : f32
    %21 = vector.broadcast %cst : f32 to vector<8x128xf32>
    %c0 = arith.constant 0 : index
    %c0_4 = arith.constant 0 : index
    %c0_5 = arith.constant 0 : index
    %22 = vector.load %arg7[%c0, %c0_4, %c0_5] : memref<1x8x512xf32, #tpu.memory_space<vmem>>, vector<1x8x128xf32>
    %23 = vector.shape_cast %22 : vector<1x8x128xf32> to vector<8x128xf32>
    %24 = vector.shape_cast %21 : vector<8x128xf32> to vector<1x8x128xf32>
    tpu.vector_store %arg7[%c0, %c0_4, %c0_5], %24 {strides = array<i32>} : memref<1x8x512xf32, #tpu.memory_space<vmem>>, vector<1x8x128xf32>,
    %cst_6 = arith.constant 0.000000e+00 : f32
    %25 = vector.broadcast %cst_6 : f32 to vector<8x128xf32>
    %c0_7 = arith.constant 0 : index
    %c0_8 = arith.constant 0 : index
    %c384 = arith.constant 384 : index
    %26 = vector.load %arg7[%c0_7, %c0_8, %c384] : memref<1x8x512xf32, #tpu.memory_space<vmem>>, vector<1x8x128xf32>
    %27 = vector.shape_cast %26 : vector<1x8x128xf32> to vector<8x128xf32>
    %28 = vector.shape_cast %25 : vector<8x128xf32> to vector<1x8x128xf32>
    tpu.vector_store %arg7[%c0_7, %c0_8, %c384], %28 {strides = array<i32>} : memref<1x8x512xf32, #tpu.memory_space<vmem>>, vector<1x8x128xf32>,
    %cst_9 = arith.constant 0.000000e+00 : f32
    %29 = vector.broadcast %cst_9 : f32 to vector<4x256xf32>
    %c0_10 = arith.constant 0 : index
    %c4 = arith.constant 4 : index
    %c128 = arith.constant 128 : index
    %30 = vector.load %arg7[%c0_10, %c4, %c128] : memref<1x8x512xf32, #tpu.memory_space<vmem>>, vector<1x4x256xf32>
    %31 = vector.shape_cast %30 : vector<1x4x256xf32> to vector<4x256xf32>
    %32 = vector.shape_cast %29 : vector<4x256xf32> to vector<1x4x256xf32>
    tpu.vector_store %arg7[%c0_10, %c4, %c128], %32 {strides = array<i32>} : memref<1x8x512xf32, #tpu.memory_space<vmem>>, vector<1x4x256xf32>,
    %c0_11 = arith.constant 0 : index
    %c0_12 = arith.constant 0 : index
    %c0_13 = arith.constant 0 : index
    %33 = vector.load %arg1[%c0_11, %c0_12, %c0_13] : memref<1x4x256xf32, #tpu.memory_space<vmem>>, vector<1x4x256xf32>
    %34 = vector.shape_cast %33 : vector<1x4x256xf32> to vector<4x256xf32>
    %c0_14 = arith.constant 0 : index
    %c0_15 = arith.constant 0 : index
    %c128_16 = arith.constant 128 : index
    %35 = vector.load %arg7[%c0_14, %c0_15, %c128_16] : memref<1x8x512xf32, #tpu.memory_space<vmem>>, vector<1x4x256xf32>
    %36 = vector.shape_cast %35 : vector<1x4x256xf32> to vector<4x256xf32>
    %37 = vector.shape_cast %34 : vector<4x256xf32> to vector<1x4x256xf32>
    tpu.vector_store %arg7[%c0_14, %c0_15, %c128_16], %37 {strides = array<i32>} : memref<1x8x512xf32, #tpu.memory_space<vmem>>, vector<1x4x256xf32>,
    %38 = vector.shape_cast %18 : vector<1x256xi1> to vector<1x256xi1>
    %39 = vector.broadcast %38 : vector<1x256xi1> to vector<8x256xi1>
    %40 = vector.shape_cast %20 : vector<1x256xi1> to vector<1x256xi1>
    %41 = vector.broadcast %40 : vector<1x256xi1> to vector<8x256xi1>
    %c0_17 = arith.constant 0 : index
    %c0_18 = arith.constant 0 : index
    %c111 = arith.constant 111 : index
    %42 = vector.load %arg7[%c0_17, %c0_18, %c111] : memref<1x8x512xf32, #tpu.memory_space<vmem>>, vector<1x8x256xf32>
    %43 = vector.shape_cast %42 : vector<1x8x256xf32> to vector<8x256xf32>
    %cst_19 = arith.constant 0.000000e+00 : f32
    %44 = vector.broadcast %cst_19 : f32 to vector<8x256xf32>
    %45 = arith.select %39, %43, %44 : vector<8x256xi1>, vector<8x256xf32>
    %c0_20 = arith.constant 0 : index
    %c0_21 = arith.constant 0 : index
    %46 = vector.load %arg9[%c0_20, %c0_21] : memref<72x256xf32, #tpu.memory_space<vmem>>, vector<8x256xf32>
    tpu.vector_store %arg9[%c0_20, %c0_21], %45 {strides = array<i32>} : memref<72x256xf32, #tpu.memory_space<vmem>>, vector<8x256xf32>,
    %c0_22 = arith.constant 0 : index
    %c0_23 = arith.constant 0 : index
    %c112 = arith.constant 112 : index
    %47 = vector.load %arg7[%c0_22, %c0_23, %c112] : memref<1x8x512xf32, #tpu.memory_space<vmem>>, vector<1x8x256xf32>
    %48 = vector.shape_cast %47 : vector<1x8x256xf32> to vector<8x256xf32>
    %c8 = arith.constant 8 : index
    %c0_24 = arith.constant 0 : index
    %49 = vector.load %arg9[%c8, %c0_24] : memref<72x256xf32, #tpu.memory_space<vmem>>, vector<8x256xf32>
    tpu.vector_store %arg9[%c8, %c0_24], %48 {strides = array<i32>} : memref<72x256xf32, #tpu.memory_space<vmem>>, vector<8x256xf32>,
    %c0_25 = arith.constant 0 : index
    %c0_26 = arith.constant 0 : index
    %c113 = arith.constant 113 : index
    %50 = vector.load %arg7[%c0_25, %c0_26, %c113] : memref<1x8x512xf32, #tpu.memory_space<vmem>>, vector<1x8x256xf32>
    %51 = vector.shape_cast %50 : vector<1x8x256xf32> to vector<8x256xf32>
    %cst_27 = arith.constant 0.000000e+00 : f32
    %52 = vector.broadcast %cst_27 : f32 to vector<8x256xf32>
    %53 = arith.select %41, %51, %52 : vector<8x256xi1>, vector<8x256xf32>
    %c16 = arith.constant 16 : index
    %c0_28 = arith.constant 0 : index
    %54 = vector.load %arg9[%c16, %c0_28] : memref<72x256xf32, #tpu.memory_space<vmem>>, vector<8x256xf32>
    tpu.vector_store %arg9[%c16, %c0_28], %53 {strides = array<i32>} : memref<72x256xf32, #tpu.memory_space<vmem>>, vector<8x256xf32>,
    %c0_29 = arith.constant 0 : index
    %c0_30 = arith.constant 0 : index
    %c127 = arith.constant 127 : index
    %55 = vector.load %arg7[%c0_29, %c0_30, %c127] : memref<1x8x512xf32, #tpu.memory_space<vmem>>, vector<1x8x256xf32>
    %56 = vector.shape_cast %55 : vector<1x8x256xf32> to vector<8x256xf32>
    %cst_31 = arith.constant 0.000000e+00 : f32
    %57 = vector.broadcast %cst_31 : f32 to vector<8x256xf32>
    %58 = arith.select %39, %56, %57 : vector<8x256xi1>, vector<8x256xf32>
    %c24 = arith.constant 24 : index
    %c0_32 = arith.constant 0 : index
    %59 = vector.load %arg9[%c24, %c0_32] : memref<72x256xf32, #tpu.memory_space<vmem>>, vector<8x256xf32>
    tpu.vector_store %arg9[%c24, %c0_32], %58 {strides = array<i32>} : memref<72x256xf32, #tpu.memory_space<vmem>>, vector<8x256xf32>,
    %c0_33 = arith.constant 0 : index
    %c0_34 = arith.constant 0 : index
    %c128_35 = arith.constant 128 : index
    %60 = vector.load %arg7[%c0_33, %c0_34, %c128_35] : memref<1x8x512xf32, #tpu.memory_space<vmem>>, vector<1x8x256xf32>
    %61 = vector.shape_cast %60 : vector<1x8x256xf32> to vector<8x256xf32>
    %c32 = arith.constant 32 : index
    %c0_36 = arith.constant 0 : index
    %62 = vector.load %arg9[%c32, %c0_36] : memref<72x256xf32, #tpu.memory_space<vmem>>, vector<8x256xf32>
    tpu.vector_store %arg9[%c32, %c0_36], %61 {strides = array<i32>} : memref<72x256xf32, #tpu.memory_space<vmem>>, vector<8x256xf32>,
    %c0_37 = arith.constant 0 : index
    %c0_38 = arith.constant 0 : index
    %c129 = arith.constant 129 : index
    %63 = vector.load %arg7[%c0_37, %c0_38, %c129] : memref<1x8x512xf32, #tpu.memory_space<vmem>>, vector<1x8x256xf32>
    %64 = vector.shape_cast %63 : vector<1x8x256xf32> to vector<8x256xf32>
    %cst_39 = arith.constant 0.000000e+00 : f32
    %65 = vector.broadcast %cst_39 : f32 to vector<8x256xf32>
    %66 = arith.select %41, %64, %65 : vector<8x256xi1>, vector<8x256xf32>
    %c40 = arith.constant 40 : index
    %c0_40 = arith.constant 0 : index
    %67 = vector.load %arg9[%c40, %c0_40] : memref<72x256xf32, #tpu.memory_space<vmem>>, vector<8x256xf32>
    tpu.vector_store %arg9[%c40, %c0_40], %66 {strides = array<i32>} : memref<72x256xf32, #tpu.memory_space<vmem>>, vector<8x256xf32>,
    %c0_41 = arith.constant 0 : index
    %c0_42 = arith.constant 0 : index
    %c143 = arith.constant 143 : index
    %68 = vector.load %arg7[%c0_41, %c0_42, %c143] : memref<1x8x512xf32, #tpu.memory_space<vmem>>, vector<1x8x256xf32>
    %69 = vector.shape_cast %68 : vector<1x8x256xf32> to vector<8x256xf32>
    %cst_43 = arith.constant 0.000000e+00 : f32
    %70 = vector.broadcast %cst_43 : f32 to vector<8x256xf32>
    %71 = arith.select %39, %69, %70 : vector<8x256xi1>, vector<8x256xf32>
    %c48 = arith.constant 48 : index
    %c0_44 = arith.constant 0 : index
    %72 = vector.load %arg9[%c48, %c0_44] : memref<72x256xf32, #tpu.memory_space<vmem>>, vector<8x256xf32>
    tpu.vector_store %arg9[%c48, %c0_44], %71 {strides = array<i32>} : memref<72x256xf32, #tpu.memory_space<vmem>>, vector<8x256xf32>,
    %c0_45 = arith.constant 0 : index
    %c0_46 = arith.constant 0 : index
    %c144 = arith.constant 144 : index
    %73 = vector.load %arg7[%c0_45, %c0_46, %c144] : memref<1x8x512xf32, #tpu.memory_space<vmem>>, vector<1x8x256xf32>
    %74 = vector.shape_cast %73 : vector<1x8x256xf32> to vector<8x256xf32>
    %c56 = arith.constant 56 : index
    %c0_47 = arith.constant 0 : index
    %75 = vector.load %arg9[%c56, %c0_47] : memref<72x256xf32, #tpu.memory_space<vmem>>, vector<8x256xf32>
    tpu.vector_store %arg9[%c56, %c0_47], %74 {strides = array<i32>} : memref<72x256xf32, #tpu.memory_space<vmem>>, vector<8x256xf32>,
    %c0_48 = arith.constant 0 : index
    %c0_49 = arith.constant 0 : index
    %c145 = arith.constant 145 : index
    %76 = vector.load %arg7[%c0_48, %c0_49, %c145] : memref<1x8x512xf32, #tpu.memory_space<vmem>>, vector<1x8x256xf32>
    %77 = vector.shape_cast %76 : vector<1x8x256xf32> to vector<8x256xf32>
    %cst_50 = arith.constant 0.000000e+00 : f32
    %78 = vector.broadcast %cst_50 : f32 to vector<8x256xf32>
    %79 = arith.select %41, %77, %78 : vector<8x256xi1>, vector<8x256xf32>
    %c64 = arith.constant 64 : index
    %c0_51 = arith.constant 0 : index
    %80 = vector.load %arg9[%c64, %c0_51] : memref<72x256xf32, #tpu.memory_space<vmem>>, vector<8x256xf32>
    tpu.vector_store %arg9[%c64, %c0_51], %79 {strides = array<i32>} : memref<72x256xf32, #tpu.memory_space<vmem>>, vector<8x256xf32>,
    %c0_52 = arith.constant 0 : index
    %c0_53 = arith.constant 0 : index
    %81 = vector.load %arg9[%c0_52, %c0_53] : memref<72x256xf32, #tpu.memory_space<vmem>>, vector<72x256xf32>
    %c0_54 = arith.constant 0 : index
    %c0_55 = arith.constant 0 : index
    %82 = vector.load %arg2[%c0_54, %c0_55] : memref<8x72xf32, #tpu.memory_space<vmem>>, vector<8x72xf32>
    %cst_56 = arith.constant dense<0.000000e+00> : vector<8x256xf32>
    %83 = tpu.matmul %82, %81, %cst_56 {dimension_numbers = #tpu.dot_dimension_numbers<[1], [0], [0], [1], [0, 0, 1, 1], [], []>} : vector<8x72xf32>, vector<72x256xf32>, vector<8x256xf32> -> vector<8x256xf32>
    %c0_57 = arith.constant 0 : index
    %c0_58 = arith.constant 0 : index
    %84 = vector.load %arg3[%c0_57, %c0_58] : memref<8x1xf32, #tpu.memory_space<vmem>>, vector<8x1xf32>
    %85 = vector.broadcast %84 : vector<8x1xf32> to vector<8x256xf32>
    %86 = arith.addf %83, %85 : vector<8x256xf32>
    %cst_59 = arith.constant 0.000000e+00 : f32
    %87 = vector.broadcast %cst_59 : f32 to vector<8x256xf32>
    %88 = arith.maximumf %86, %87 : vector<8x256xf32>
    %cst_60 = arith.constant 0.000000e+00 : f32
    %89 = vector.broadcast %cst_60 : f32 to vector<8x128xf32>
    %c0_61 = arith.constant 0 : index
    %c0_62 = arith.constant 0 : index
    %c0_63 = arith.constant 0 : index
    %90 = vector.load %arg8[%c0_61, %c0_62, %c0_63] : memref<1x8x512xf32, #tpu.memory_space<vmem>>, vector<1x8x128xf32>
    %91 = vector.shape_cast %90 : vector<1x8x128xf32> to vector<8x128xf32>
    %92 = vector.shape_cast %89 : vector<8x128xf32> to vector<1x8x128xf32>
    tpu.vector_store %arg8[%c0_61, %c0_62, %c0_63], %92 {strides = array<i32>} : memref<1x8x512xf32, #tpu.memory_space<vmem>>, vector<1x8x128xf32>,
    %cst_64 = arith.constant 0.000000e+00 : f32
    %93 = vector.broadcast %cst_64 : f32 to vector<8x128xf32>
    %c0_65 = arith.constant 0 : index
    %c0_66 = arith.constant 0 : index
    %c384_67 = arith.constant 384 : index
    %94 = vector.load %arg8[%c0_65, %c0_66, %c384_67] : memref<1x8x512xf32, #tpu.memory_space<vmem>>, vector<1x8x128xf32>
    %95 = vector.shape_cast %94 : vector<1x8x128xf32> to vector<8x128xf32>
    %96 = vector.shape_cast %93 : vector<8x128xf32> to vector<1x8x128xf32>
    tpu.vector_store %arg8[%c0_65, %c0_66, %c384_67], %96 {strides = array<i32>} : memref<1x8x512xf32, #tpu.memory_space<vmem>>, vector<1x8x128xf32>,
    %c0_68 = arith.constant 0 : index
    %c0_69 = arith.constant 0 : index
    %c128_70 = arith.constant 128 : index
    %97 = vector.load %arg8[%c0_68, %c0_69, %c128_70] : memref<1x8x512xf32, #tpu.memory_space<vmem>>, vector<1x8x256xf32>
    %98 = vector.shape_cast %97 : vector<1x8x256xf32> to vector<8x256xf32>
    %99 = vector.shape_cast %88 : vector<8x256xf32> to vector<1x8x256xf32>
    tpu.vector_store %arg8[%c0_68, %c0_69, %c128_70], %99 {strides = array<i32>} : memref<1x8x512xf32, #tpu.memory_space<vmem>>, vector<1x8x256xf32>,
    %100 = vector.shape_cast %18 : vector<1x256xi1> to vector<1x256xi1>
    %101 = vector.broadcast %100 : vector<1x256xi1> to vector<8x256xi1>
    %102 = vector.shape_cast %20 : vector<1x256xi1> to vector<1x256xi1>
    %103 = vector.broadcast %102 : vector<1x256xi1> to vector<8x256xi1>
    %c0_71 = arith.constant 0 : index
    %c0_72 = arith.constant 0 : index
    %c111_73 = arith.constant 111 : index
    %104 = vector.load %arg8[%c0_71, %c0_72, %c111_73] : memref<1x8x512xf32, #tpu.memory_space<vmem>>, vector<1x8x256xf32>
    %105 = vector.shape_cast %104 : vector<1x8x256xf32> to vector<8x256xf32>
    %cst_74 = arith.constant 0.000000e+00 : f32
    %106 = vector.broadcast %cst_74 : f32 to vector<8x256xf32>
    %107 = arith.select %101, %105, %106 : vector<8x256xi1>, vector<8x256xf32>
    %c0_75 = arith.constant 0 : index
    %c0_76 = arith.constant 0 : index
    %108 = vector.load %arg10[%c0_75, %c0_76] : memref<72x256xf32, #tpu.memory_space<vmem>>, vector<8x256xf32>
    tpu.vector_store %arg10[%c0_75, %c0_76], %107 {strides = array<i32>} : memref<72x256xf32, #tpu.memory_space<vmem>>, vector<8x256xf32>,
    %c0_77 = arith.constant 0 : index
    %c0_78 = arith.constant 0 : index
    %c112_79 = arith.constant 112 : index
    %109 = vector.load %arg8[%c0_77, %c0_78, %c112_79] : memref<1x8x512xf32, #tpu.memory_space<vmem>>, vector<1x8x256xf32>
    %110 = vector.shape_cast %109 : vector<1x8x256xf32> to vector<8x256xf32>
    %c8_80 = arith.constant 8 : index
    %c0_81 = arith.constant 0 : index
    %111 = vector.load %arg10[%c8_80, %c0_81] : memref<72x256xf32, #tpu.memory_space<vmem>>, vector<8x256xf32>
    tpu.vector_store %arg10[%c8_80, %c0_81], %110 {strides = array<i32>} : memref<72x256xf32, #tpu.memory_space<vmem>>, vector<8x256xf32>,
    %c0_82 = arith.constant 0 : index
    %c0_83 = arith.constant 0 : index
    %c113_84 = arith.constant 113 : index
    %112 = vector.load %arg8[%c0_82, %c0_83, %c113_84] : memref<1x8x512xf32, #tpu.memory_space<vmem>>, vector<1x8x256xf32>
    %113 = vector.shape_cast %112 : vector<1x8x256xf32> to vector<8x256xf32>
    %cst_85 = arith.constant 0.000000e+00 : f32
    %114 = vector.broadcast %cst_85 : f32 to vector<8x256xf32>
    %115 = arith.select %103, %113, %114 : vector<8x256xi1>, vector<8x256xf32>
    %c16_86 = arith.constant 16 : index
    %c0_87 = arith.constant 0 : index
    %116 = vector.load %arg10[%c16_86, %c0_87] : memref<72x256xf32, #tpu.memory_space<vmem>>, vector<8x256xf32>
    tpu.vector_store %arg10[%c16_86, %c0_87], %115 {strides = array<i32>} : memref<72x256xf32, #tpu.memory_space<vmem>>, vector<8x256xf32>,
    %c0_88 = arith.constant 0 : index
    %c0_89 = arith.constant 0 : index
    %c127_90 = arith.constant 127 : index
    %117 = vector.load %arg8[%c0_88, %c0_89, %c127_90] : memref<1x8x512xf32, #tpu.memory_space<vmem>>, vector<1x8x256xf32>
    %118 = vector.shape_cast %117 : vector<1x8x256xf32> to vector<8x256xf32>
    %cst_91 = arith.constant 0.000000e+00 : f32
    %119 = vector.broadcast %cst_91 : f32 to vector<8x256xf32>
    %120 = arith.select %101, %118, %119 : vector<8x256xi1>, vector<8x256xf32>
    %c24_92 = arith.constant 24 : index
    %c0_93 = arith.constant 0 : index
    %121 = vector.load %arg10[%c24_92, %c0_93] : memref<72x256xf32, #tpu.memory_space<vmem>>, vector<8x256xf32>
    tpu.vector_store %arg10[%c24_92, %c0_93], %120 {strides = array<i32>} : memref<72x256xf32, #tpu.memory_space<vmem>>, vector<8x256xf32>,
    %c32_94 = arith.constant 32 : index
    %c0_95 = arith.constant 0 : index
    %122 = vector.load %arg10[%c32_94, %c0_95] : memref<72x256xf32, #tpu.memory_space<vmem>>, vector<8x256xf32>
    tpu.vector_store %arg10[%c32_94, %c0_95], %88 {strides = array<i32>} : memref<72x256xf32, #tpu.memory_space<vmem>>, vector<8x256xf32>,
    %c0_96 = arith.constant 0 : index
    %c0_97 = arith.constant 0 : index
    %c129_98 = arith.constant 129 : index
    %123 = vector.load %arg8[%c0_96, %c0_97, %c129_98] : memref<1x8x512xf32, #tpu.memory_space<vmem>>, vector<1x8x256xf32>
    %124 = vector.shape_cast %123 : vector<1x8x256xf32> to vector<8x256xf32>
    %cst_99 = arith.constant 0.000000e+00 : f32
    %125 = vector.broadcast %cst_99 : f32 to vector<8x256xf32>
    %126 = arith.select %103, %124, %125 : vector<8x256xi1>, vector<8x256xf32>
    %c40_100 = arith.constant 40 : index
    %c0_101 = arith.constant 0 : index
    %127 = vector.load %arg10[%c40_100, %c0_101] : memref<72x256xf32, #tpu.memory_space<vmem>>, vector<8x256xf32>
    tpu.vector_store %arg10[%c40_100, %c0_101], %126 {strides = array<i32>} : memref<72x256xf32, #tpu.memory_space<vmem>>, vector<8x256xf32>,
    %c0_102 = arith.constant 0 : index
    %c0_103 = arith.constant 0 : index
    %c143_104 = arith.constant 143 : index
    %128 = vector.load %arg8[%c0_102, %c0_103, %c143_104] : memref<1x8x512xf32, #tpu.memory_space<vmem>>, vector<1x8x256xf32>
    %129 = vector.shape_cast %128 : vector<1x8x256xf32> to vector<8x256xf32>
    %cst_105 = arith.constant 0.000000e+00 : f32
    %130 = vector.broadcast %cst_105 : f32 to vector<8x256xf32>
    %131 = arith.select %101, %129, %130 : vector<8x256xi1>, vector<8x256xf32>
    %c48_106 = arith.constant 48 : index
    %c0_107 = arith.constant 0 : index
    %132 = vector.load %arg10[%c48_106, %c0_107] : memref<72x256xf32, #tpu.memory_space<vmem>>, vector<8x256xf32>
    tpu.vector_store %arg10[%c48_106, %c0_107], %131 {strides = array<i32>} : memref<72x256xf32, #tpu.memory_space<vmem>>, vector<8x256xf32>,
    %c0_108 = arith.constant 0 : index
    %c0_109 = arith.constant 0 : index
    %c144_110 = arith.constant 144 : index
    %133 = vector.load %arg8[%c0_108, %c0_109, %c144_110] : memref<1x8x512xf32, #tpu.memory_space<vmem>>, vector<1x8x256xf32>
    %134 = vector.shape_cast %133 : vector<1x8x256xf32> to vector<8x256xf32>
    %c56_111 = arith.constant 56 : index
    %c0_112 = arith.constant 0 : index
    %135 = vector.load %arg10[%c56_111, %c0_112] : memref<72x256xf32, #tpu.memory_space<vmem>>, vector<8x256xf32>
    tpu.vector_store %arg10[%c56_111, %c0_112], %134 {strides = array<i32>} : memref<72x256xf32, #tpu.memory_space<vmem>>, vector<8x256xf32>,
    %c0_113 = arith.constant 0 : index
    %c0_114 = arith.constant 0 : index
    %c145_115 = arith.constant 145 : index
    %136 = vector.load %arg8[%c0_113, %c0_114, %c145_115] : memref<1x8x512xf32, #tpu.memory_space<vmem>>, vector<1x8x256xf32>
    %137 = vector.shape_cast %136 : vector<1x8x256xf32> to vector<8x256xf32>
    %cst_116 = arith.constant 0.000000e+00 : f32
    %138 = vector.broadcast %cst_116 : f32 to vector<8x256xf32>
    %139 = arith.select %103, %137, %138 : vector<8x256xi1>, vector<8x256xf32>
    %c64_117 = arith.constant 64 : index
    %c0_118 = arith.constant 0 : index
    %140 = vector.load %arg10[%c64_117, %c0_118] : memref<72x256xf32, #tpu.memory_space<vmem>>, vector<8x256xf32>
    tpu.vector_store %arg10[%c64_117, %c0_118], %139 {strides = array<i32>} : memref<72x256xf32, #tpu.memory_space<vmem>>, vector<8x256xf32>,
    %c0_119 = arith.constant 0 : index
    %c0_120 = arith.constant 0 : index
    %141 = vector.load %arg10[%c0_119, %c0_120] : memref<72x256xf32, #tpu.memory_space<vmem>>, vector<72x256xf32>
    %c0_121 = arith.constant 0 : index
    %c0_122 = arith.constant 0 : index
    %142 = vector.load %arg4[%c0_121, %c0_122] : memref<8x72xf32, #tpu.memory_space<vmem>>, vector<8x72xf32>
    %cst_123 = arith.constant dense<0.000000e+00> : vector<8x256xf32>
    %143 = tpu.matmul %142, %141, %cst_123 {dimension_numbers = #tpu.dot_dimension_numbers<[1], [0], [0], [1], [0, 0, 1, 1], [], []>} : vector<8x72xf32>, vector<72x256xf32>, vector<8x256xf32> -> vector<8x256xf32>
    %c0_124 = arith.constant 0 : index
    %c0_125 = arith.constant 0 : index
    %144 = vector.load %arg5[%c0_124, %c0_125] : memref<8x1xf32, #tpu.memory_space<vmem>>, vector<8x1xf32>
    %145 = vector.broadcast %144 : vector<8x1xf32> to vector<8x256xf32>
    %146 = arith.addf %143, %145 : vector<8x256xf32>
    %cst_126 = arith.constant 0.000000e+00 : f32
    %147 = vector.broadcast %cst_126 : f32 to vector<8x256xf32>
    %148 = arith.maximumf %146, %147 : vector<8x256xf32>
    %c0_127 = arith.constant 0 : index
    %c0_128 = arith.constant 0 : index
    %c0_129 = arith.constant 0 : index
    %149 = vector.load %arg6[%c0_127, %c0_128, %c0_129] : memref<1x8x256xf32, #tpu.memory_space<vmem>>, vector<1x8x256xf32>
    %150 = vector.shape_cast %149 : vector<1x8x256xf32> to vector<8x256xf32>
    %151 = vector.shape_cast %148 : vector<8x256xf32> to vector<1x8x256xf32>
    tpu.vector_store %arg6[%c0_127, %c0_128, %c0_129], %151 {strides = array<i32>} : memref<1x8x256xf32, #tpu.memory_space<vmem>>, vector<1x8x256xf32>,
    return
  }
  func.func @transform_0(%arg0: i32) -> (i32, i32, i32) {
    %c0_i32 = arith.constant 0 : i32
    %c0_i32_0 = arith.constant 0 : i32
    %c0_i32_1 = arith.constant 0 : i32
    return %arg0, %c0_i32, %c0_i32_0 : i32, i32, i32
  }
  func.func @transform_1(%arg0: i32) -> (i32, i32) {
    %c0_i32 = arith.constant 0 : i32
    %c0_i32_0 = arith.constant 0 : i32
    %c0_i32_1 = arith.constant 0 : i32
    return %c0_i32, %c0_i32_0 : i32, i32
  }
  func.func @transform_2(%arg0: i32) -> (i32, i32) {
    %c0_i32 = arith.constant 0 : i32
    %c0_i32_0 = arith.constant 0 : i32
    %c0_i32_1 = arith.constant 0 : i32
    return %c0_i32, %c0_i32_0 : i32, i32
  }
  func.func @transform_3(%arg0: i32) -> (i32, i32) {
    %c0_i32 = arith.constant 0 : i32
    %c0_i32_0 = arith.constant 0 : i32
    %c0_i32_1 = arith.constant 0 : i32
    return %c0_i32, %c0_i32_0 : i32, i32
  }
  func.func @transform_4(%arg0: i32) -> (i32, i32) {
    %c0_i32 = arith.constant 0 : i32
    %c0_i32_0 = arith.constant 0 : i32
    %c0_i32_1 = arith.constant 0 : i32
    return %c0_i32, %c0_i32_0 : i32, i32
  }
  func.func @transform_5(%arg0: i32) -> (i32, i32, i32) {
    %c0_i32 = arith.constant 0 : i32
    %c0_i32_0 = arith.constant 0 : i32
    %c0_i32_1 = arith.constant 0 : i32
    return %arg0, %c0_i32, %c0_i32_0 : i32, i32, i32
  }
}

</mosaic_0001>

<llo_original>
// kernel: double_conv2_forward.1
$region0: #{double_conv2_forward.1}
  #allocation0 [shape = 'u32[]', space=smem, size = 0x4, offset = 0x4, fixed_abs, tag = 'smem constant byte address 0x4 - core index']
  #allocation1 [shape = 'u32[72,128]{1,0:T(1,128)}', space=vmem, size = 0x9000, scoped, tag = 'internal scratch']
  #allocation2 [shape = 'f32[1,8,512]{2,1,0:T(8,128)}', space=vmem, size = 0x4000, scoped, tag = 'scratch operand']
  #allocation3 [shape = 'f32[1,8,512]{2,1,0:T(8,128)}', space=vmem, size = 0x4000, scoped, tag = 'scratch operand']
  #allocation4 [shape = 'f32[72,256]{1,0:T(8,128)}', space=vmem, size = 0x12000, scoped, tag = 'scratch operand']
  #allocation5 [shape = 'f32[72,256]{1,0:T(8,128)}', space=vmem, size = 0x12000, scoped, tag = 'scratch operand']
  %s0 = inlined_call_operand.vmem [shape: f32[2,4,256], index: 0, kind: input, shape index: {}]
  %s1 = inlined_call_operand.vmem [shape: f32[8,72], index: 1, kind: input, shape index: {}]
  %s2 = inlined_call_operand.vmem [shape: f32[8,1], index: 2, kind: input, shape index: {}]
  %s3 = inlined_call_operand.vmem [shape: f32[8,72], index: 3, kind: input, shape index: {}]
  %s4 = inlined_call_operand.vmem [shape: f32[8,1], index: 4, kind: input, shape index: {}]
  %s5 = inlined_call_operand.vmem [shape: f32[2,8,256], index: 5, kind: output, shape index: {}]
  %s6 = sld [smem:[#allocation0]]
  $region53: #{double_conv2_forward.1} parent=0
    _
  %s8 = ssub.s32 1, %s6
  %s9 = scalar_select 0, %s8, %s6
  loop: start=0, step=1, limit=4
  $region2: #{double_conv2_forward.1} parent=0 // loop_pre_header
    _
  $region3: #{double_conv2_forward.1} parent=0 // loop_header
    %s11 = sphi 0, %s15
    %p12 = scmp.ge.s32.totalorder %s11, 4
    %s21 = sphi 0, %s23
    %s24 = sphi 0, %s21
    %s25 = sphi 0, %s24
    %s41 = sphi 0, %s25
    %s45 = sphi 0, %s45
    %s47 = sphi 0, %s45
    %s48 = sphi 0, %s47
    %s62 = sphi 0, %s48
    %s66 = sphi 0, %s66
    %s68 = sphi 0, %s66
    %s69 = sphi 0, %s68
    %s83 = sphi 0, %s69
    %s87 = sphi 0, %s87
    %s89 = sphi 0, %s87
    %s90 = sphi 0, %s89
    %s104 = sphi 0, %s90
    %s108 = sphi 0, %s108
    %s110 = sphi 0, %s108
    %s111 = sphi 0, %s110
    %s125 = sphi 0, %s111
    %s131 = sphi 0, %s133
    %s134 = sphi 0, %s131
    %s135 = sphi 0, %s134
    %s151 = sphi 0, %s135
  $region4: #{double_conv2_forward.1} parent=0 // loop_header_branch
    %14 = sbr.rel (%p12) target = $region8
  $region5: #{double_conv2_forward.1} parent=0 // loop_body
    %s16 = ssub.s32 %s11, 1
    %s17 = ssub.s32 %s11, 2
    %s18 = sadd.s32 %s11, 1
    %s19 = ssub.s32 %s11, %s18
    %p20 = scmp.eq.s32.totalorder %s19, 0
    %s22 = sadd.s32 %s21, 1
    %s23 = scalar_select %p20, %s21, %s22
    %p26 = pneg %p20
    %p27 = scmp.eq.s32.totalorder %s11, 1
    %p28 = por %p26, %p27
    %p29 = scmp.ne.s32.totalorder %s21, %s24
    %p30 = scmp.eq.s32.totalorder %s11, 0
    %p31 = por %p29, %p30
    %p32 = scmp.ne.s32.totalorder %s21, %s24
    %p33 = scmp.eq.s32.totalorder %s16, 1
    %p34 = por %p32, %p33
    %p35 = scmp.ne.s32.totalorder %s24, %s25
    %p36 = scmp.eq.s32.totalorder %s16, 0
    %p37 = por %p35, %p36
    %p38 = scmp.ne.s32.totalorder %s24, %s25
    %p39 = scmp.eq.s32.totalorder %s17, 1
    %p40 = por %p38, %p39
    %p42 = scmp.ne.s32.totalorder %s25, %s41
    %p43 = scmp.eq.s32.totalorder %s17, 0
    %p44 = por %p42, %p43
    %s46 = sadd.s32 %s45, 1
    %p49 = scmp.eq.s32.totalorder %s11, 1
    %p50 = scmp.ne.s32.totalorder %s45, %s47
    %p51 = scmp.eq.s32.totalorder %s11, 0
    %p52 = por %p50, %p51
    %p53 = scmp.ne.s32.totalorder %s45, %s47
    %p54 = scmp.eq.s32.totalorder %s16, 1
    %p55 = por %p53, %p54
    %p56 = scmp.ne.s32.totalorder %s47, %s48
    %p57 = scmp.eq.s32.totalorder %s16, 0
    %p58 = por %p56, %p57
    %p59 = scmp.ne.s32.totalorder %s47, %s48
    %p60 = scmp.eq.s32.totalorder %s17, 1
    %p61 = por %p59, %p60
    %p63 = scmp.ne.s32.totalorder %s48, %s62
    %p64 = scmp.eq.s32.totalorder %s17, 0
    %p65 = por %p63, %p64
    %s67 = sadd.s32 %s66, 1
    %p70 = scmp.eq.s32.totalorder %s11, 1
    %p71 = scmp.ne.s32.totalorder %s66, %s68
    %p72 = scmp.eq.s32.totalorder %s11, 0
    %p73 = por %p71, %p72
    %p74 = scmp.ne.s32.totalorder %s66, %s68
    %p75 = scmp.eq.s32.totalorder %s16, 1
    %p76 = por %p74, %p75
    %p77 = scmp.ne.s32.totalorder %s68, %s69
    %p78 = scmp.eq.s32.totalorder %s16, 0
    %p79 = por %p77, %p78
    %p80 = scmp.ne.s32.totalorder %s68, %s69
    %p81 = scmp.eq.s32.totalorder %s17, 1
    %p82 = por %p80, %p81
    %p84 = scmp.ne.s32.totalorder %s69, %s83
    %p85 = scmp.eq.s32.totalorder %s17, 0
    %p86 = por %p84, %p85
    %s88 = sadd.s32 %s87, 1
    %p91 = scmp.eq.s32.totalorder %s11, 1
    %p92 = scmp.ne.s32.totalorder %s87, %s89
    %p93 = scmp.eq.s32.totalorder %s11, 0
    %p94 = por %p92, %p93
    %p95 = scmp.ne.s32.totalorder %s87, %s89
    %p96 = scmp.eq.s32.totalorder %s16, 1
    %p97 = por %p95, %p96
    %p98 = scmp.ne.s32.totalorder %s89, %s90
    %p99 = scmp.eq.s32.totalorder %s16, 0
    %p100 = por %p98, %p99
    %p101 = scmp.ne.s32.totalorder %s89, %s90
    %p102 = scmp.eq.s32.totalorder %s17, 1
    %p103 = por %p101, %p102
    %p105 = scmp.ne.s32.totalorder %s90, %s104
    %p106 = scmp.eq.s32.totalorder %s17, 0
    %p107 = por %p105, %p106
    %s109 = sadd.s32 %s108, 1
    %p112 = scmp.eq.s32.totalorder %s11, 1
    %p113 = scmp.ne.s32.totalorder %s108, %s110
    %p114 = scmp.eq.s32.totalorder %s11, 0
    %p115 = por %p113, %p114
    %p116 = scmp.ne.s32.totalorder %s108, %s110
    %p117 = scmp.eq.s32.totalorder %s16, 1
    %p118 = por %p116, %p117
    %p119 = scmp.ne.s32.totalorder %s110, %s111
    %p120 = scmp.eq.s32.totalorder %s16, 0
    %p121 = por %p119, %p120
    %p122 = scmp.ne.s32.totalorder %s110, %s111
    %p123 = scmp.eq.s32.totalorder %s17, 1
    %p124 = por %p122, %p123
    %p126 = scmp.ne.s32.totalorder %s111, %s125
    %p127 = scmp.eq.s32.totalorder %s17, 0
    %p128 = por %p126, %p127
    %s129 = ssub.s32 %s11, %s18
    %p130 = scmp.eq.s32.totalorder %s129, 0
    %s132 = sadd.s32 %s131, 1
    %s133 = scalar_select %p130, %s131, %s132
    %p136 = pneg %p130
    %p137 = scmp.eq.s32.totalorder %s11, 1
    %p138 = por %p136, %p137
    %p139 = scmp.ne.s32.totalorder %s131, %s134
    %p140 = scmp.eq.s32.totalorder %s11, 0
    %p141 = por %p139, %p140
    %p142 = scmp.ne.s32.totalorder %s131, %s134
    %p143 = scmp.eq.s32.totalorder %s16, 1
    %p144 = por %p142, %p143
    %p145 = scmp.ne.s32.totalorder %s134, %s135
    %p146 = scmp.eq.s32.totalorder %s16, 0
    %p147 = por %p145, %p146
    %p148 = scmp.ne.s32.totalorder %s134, %s135
    %p149 = scmp.eq.s32.totalorder %s17, 1
    %p150 = por %p148, %p149
    %p152 = scmp.ne.s32.totalorder %s135, %s151
    %p153 = scmp.eq.s32.totalorder %s17, 0
    %p154 = por %p152, %p153
    %p155 = scmp.le.s32.totalorder 1, %s11
    %p156 = scmp.lt.s32.totalorder %s11, 3
    %p157 = pnand %p155, %p156
    %p158 = pneg %p157
    // Predicated region
    $region9: #{double_conv2_forward.1} parent=5 // pred_check
      _
    $region10: #{double_conv2_forward.1} parent=5 // pred_check_branch
      %160 = sbr.rel (%p157) target = $region12
    $region11: #{double_conv2_forward.1} parent=5 // pred_region
      %s161 = ssub.s32 %s11, 1
      // Predicated region
      $region13: #{double_conv2_forward.1} parent=11 // pred_check
        %p162 = pneg %p58
      $region14: #{double_conv2_forward.1} parent=11 // pred_check_branch
        %164 = sbr.rel (%p162) target = $region16
      $region15: #{double_conv2_forward.1} parent=11 // pred_region
        _
      $region16: #{double_conv2_forward.1} parent=11 // pred_fallthru
        _
      // Predicated region
      $region17: #{double_conv2_forward.1} parent=11 // pred_check
        %p165 = pneg %p79
      $region18: #{double_conv2_forward.1} parent=11 // pred_check_branch
        %167 = sbr.rel (%p165) target = $region20
      $region19: #{double_conv2_forward.1} parent=11 // pred_region
        _
      $region20: #{double_conv2_forward.1} parent=11 // pred_fallthru
        _
      // Predicated region
      $region21: #{double_conv2_forward.1} parent=11 // pred_check
        %p168 = pneg %p100
      $region22: #{double_conv2_forward.1} parent=11 // pred_check_branch
        %170 = sbr.rel (%p168) target = $region24
      $region23: #{double_conv2_forward.1} parent=11 // pred_region
        _
      $region24: #{double_conv2_forward.1} parent=11 // pred_fallthru
        _
      // Predicated region
      $region25: #{double_conv2_forward.1} parent=11 // pred_check
        %p171 = pneg %p121
      $region26: #{double_conv2_forward.1} parent=11 // pred_check_branch
        %173 = sbr.rel (%p171) target = $region28
      $region27: #{double_conv2_forward.1} parent=11 // pred_region
        _
      $region28: #{double_conv2_forward.1} parent=11 // pred_fallthru
        _
    $region12: #{double_conv2_forward.1} parent=5 // pred_fallthru
      _
    %p174 = scmp.lt.s32.totalorder %s11, 2
    // Predicated region
    $region29: #{double_conv2_forward.1} parent=5 // pred_check
      %p175 = pneg %p174
    $region30: #{double_conv2_forward.1} parent=5 // pred_check_branch
      %177 = sbr.rel (%p175) target = $region32
    $region31: #{double_conv2_forward.1} parent=5 // pred_region
      // Predicated region
      $region33: #{double_conv2_forward.1} parent=31 // pred_check
        %p178 = pneg %p31
      $region34: #{double_conv2_forward.1} parent=31 // pred_check_branch
        %180 = sbr.rel (%p178) target = $region36
      $region35: #{double_conv2_forward.1} parent=31 // pred_region
        %p181 = scmp.lt.s32.totalorder %s11, 1
        %s182 = scalar_select %p181, %s11, 1
        %s183 = smul.addr %s182, 2
        %s184 = smul.addr %s183, 4
        %s185 = scalar_lea.vmem %s0, %s184
      $region36: #{double_conv2_forward.1} parent=31 // pred_fallthru
        _
    $region32: #{double_conv2_forward.1} parent=5 // pred_fallthru
      _
    %p186 = scmp.le.s32.totalorder 1, %s11
    %p187 = scmp.lt.s32.totalorder %s11, 3
    %p188 = pnand %p186, %p187
    %p189 = pneg %p188
    // Predicated region
    $region37: #{double_conv2_forward.1} parent=5 // pred_check
      _
    $region38: #{double_conv2_forward.1} parent=5 // pred_check_branch
      %191 = sbr.rel (%p188) target = $region40
    $region39: #{double_conv2_forward.1} parent=5 // pred_region
      %s192 = ssub.s32 %s11, 1
      %p193 = scmp.lt.s32.totalorder %s16, 1
      %s194 = scalar_select %p193, %s16, 1
      %s195 = smul.addr %s194, 2
      %s196 = smul.addr %s195, 4
      %s197 = scalar_lea.vmem %s0, %s196
      %p198 = pneg %p37
      %p199 = pneg %p34
      %p200 = pneg %p58
      %p201 = pneg %p55
      %p202 = pneg %p79
      %p203 = pneg %p76
      %p204 = pneg %p100
      %p205 = pneg %p97
      %p206 = pneg %p121
      %p207 = pneg %p118
      %p208 = pneg %p147
      %p209 = pneg %p144
      %p210 = scmp.lt.s32.totalorder %s16, 1
      %s211 = scalar_select %p210, %s16, 1
      %s212 = smul.addr %s211, 2
      %s213 = smul.addr %s212, 8
      %s214 = scalar_lea.vmem %s5, %s213
      %p215 = scmp.lt.s32.totalorder %s16, 1
      %s216 = scalar_select %p215, %s16, 1
      %s217 = smul.addr %s216, 2
      %s218 = smul.addr %s217, 4
      %s219 = scalar_lea.vmem %s0, %s218
      %p220 = scmp.lt.s32.totalorder %s16, 1
      %s221 = scalar_select %p220, %s16, 1
      %s222 = smul.addr %s221, 2
      %s223 = smul.addr %s222, 8
      %s224 = scalar_lea.vmem %s5, %s223
      %v225 = vlaneseq
      %v226 = vand.u32 %v225, 127
      %v227 = vadd.s32 %v226, 128
      %vm228 = vcmp.lt.s32.totalorder %v226, 0
      %v229 = vsub.s32 0, %v226
      %v230 = vsel %vm228, %v229, %v226
      %v231 = vshrl.u32 %v230, 4
      %v232 = vand.u32 %v230, 15
      %v233 = vsub.s32 0, %v232
      %v234 = vsel %vm228, %v233, %v232
      %vm235 = vcmp.lt.s32.totalorder %v227, 0
      %v236 = vsub.s32 0, %v227
      %v237 = vsel %vm235, %v236, %v227
      %v238 = vshrl.u32 %v237, 4
      %v239 = vand.u32 %v237, 15
      %v240 = vsub.s32 0, %v239
      %v241 = vsel %vm235, %v240, %v239
      %vm242 = vcmp.ne.s32.totalorder %v234, 0
      %vm243 = vcmp.ne.s32.totalorder %v241, 0
      %vm244 = vcmp.lt.s32.totalorder %v234, 0
      %vm245 = vcmp.lt.s32.totalorder %v241, 0
      %vm246 = vmand %vm244, %vm242
      %vm247 = vmand %vm245, %vm243
      %v248 = vadd.s32 %v234, 16
      %v249 = vadd.s32 %v241, 16
      %v250 = vsel %vm246, %v248, %v234
      %v251 = vsel %vm247, %v249, %v241
      %vm252 = vcmp.ge.s32.totalorder %v250, 1
      %vm253 = vcmp.ge.s32.totalorder %v251, 1
      %vm254 = vcmp.le.s32.totalorder %v250, 14
      %vm255 = vcmp.le.s32.totalorder %v251, 14
      %256 = vst [vmem:[#allocation2] sm:$0xff] 0.0
      %257 = vst [vmem:[#allocation2 + $0x18] sm:$0xff] 0.0
      %258 = vst [vmem:[#allocation2 + $0x8] sm:$0xf0] 0.0
      %259 = vst [vmem:[#allocation2 + $0x10] sm:$0xf0] 0.0
      %v260 = vld [vmem:[%s219] sm:$0xff]
      %262 = vst [vmem:[#allocation1] ss:$2 sm:$0xff] %v260
      %v263 = vld.sshfl [vmem:[#allocation1] sm:$0xff pattern:$0x75316420]
      %v264 = vld.sshfl [vmem:[#allocation1 + $0x8] sm:$0xff pattern:$0x75316420]
      %267 = vst [vmem:[#allocation2 + $0x8] sm:$0xf] %v263
      %268 = vst [vmem:[#allocation2 + $0x10] sm:$0xf] %v264
      %v269 = vsel %vm252, 1, 0
      %v270 = vsel %vm253, 1, 0
      %vm271 = vcmp.eq.s32.totalorder %v269, 1
      %vm272 = vcmp.eq.s32.totalorder %v270, 1
      %v273 = vsel %vm254, 1, 0
      %v274 = vsel %vm255, 1, 0
      %vm275 = vcmp.eq.s32.totalorder %v273, 1
      %vm276 = vcmp.eq.s32.totalorder %v274, 1
      %v277 = vld [vmem:[#allocation2] sm:$0xff]
      %v278 = vld [vmem:[#allocation2 + $0x8] sm:$0xff]
      %v279 = vld [vmem:[#allocation2 + $0x10] sm:$0xff]
      %283 = vrot.lane.b32.xlu0 %v277, 17
      %v284 = vpop.permute.xlu0 %283
      %285 = vrot.lane.b32.xlu0 %v278, 17
      %v286 = vpop.permute.xlu0 %285
      %287 = vrot.lane.b32.xlu0 %v279, 17
      %v288 = vpop.permute.xlu0 %287
      %vm289 = vcmask 138240
      %v290 = vsel %vm289, %v284, %v286
      %v291 = vsel %vm289, %v286, %v288
      %v294 = vsel %vm271, %v290, 0.0
      %v295 = vsel %vm272, %v291, 0.0
      %296 = vst [vmem:[#allocation4] sm:$0xff] %v294
      %297 = vst [vmem:[#allocation4 + $0x8] sm:$0xff] %v295
      %v298 = vld [vmem:[#allocation2] sm:$0xff]
      %v299 = vld [vmem:[#allocation2 + $0x8] sm:$0xff]
      %v300 = vld [vmem:[#allocation2 + $0x10] sm:$0xff]
      %304 = vrot.lane.b32.xlu0 %v298, 16
      %v305 = vpop.permute.xlu0 %304
      %306 = vrot.lane.b32.xlu0 %v299, 16
      %v307 = vpop.permute.xlu0 %306
      %308 = vrot.lane.b32.xlu0 %v300, 16
      %v309 = vpop.permute.xlu0 %308
      %vm310 = vcmask 130048
      %v311 = vsel %vm310, %v305, %v307
      %v312 = vsel %vm310, %v307, %v309
      %315 = vst [vmem:[#allocation4 + $0x10] sm:$0xff] %v311
      %316 = vst [vmem:[#allocation4 + $0x18] sm:$0xff] %v312
      %v317 = vld [vmem:[#allocation2] sm:$0xff]
      %v318 = vld [vmem:[#allocation2 + $0x8] sm:$0xff]
      %v319 = vld [vmem:[#allocation2 + $0x10] sm:$0xff]
      %323 = vrot.lane.b32.xlu0 %v317, 15
      %v324 = vpop.permute.xlu0 %323
      %325 = vrot.lane.b32.xlu0 %v318, 15
      %v326 = vpop.permute.xlu0 %325
      %327 = vrot.lane.b32.xlu0 %v319, 15
      %v328 = vpop.permute.xlu0 %327
      %vm329 = vcmask 121856
      %v330 = vsel %vm329, %v324, %v326
      %v331 = vsel %vm329, %v326, %v328
      %v334 = vsel %vm275, %v330, 0.0
      %v335 = vsel %vm276, %v331, 0.0
      %336 = vst [vmem:[#allocation4 + $0x20] sm:$0xff] %v334
      %337 = vst [vmem:[#allocation4 + $0x28] sm:$0xff] %v335
      %v338 = vld [vmem:[#allocation2] sm:$0xff]
      %v339 = vld [vmem:[#allocation2 + $0x8] sm:$0xff]
      %v340 = vld [vmem:[#allocation2 + $0x10] sm:$0xff]
      %344 = vrot.lane.b32.xlu0 %v338, 1
      %v345 = vpop.permute.xlu0 %344
      %346 = vrot.lane.b32.xlu0 %v339, 1
      %v347 = vpop.permute.xlu0 %346
      %348 = vrot.lane.b32.xlu0 %v340, 1
      %v349 = vpop.permute.xlu0 %348
      %vm350 = vcmask 7168
      %v351 = vsel %vm350, %v345, %v347
      %v352 = vsel %vm350, %v347, %v349
      %v355 = vsel %vm271, %v351, 0.0
      %v356 = vsel %vm272, %v352, 0.0
      %357 = vst [vmem:[#allocation4 + $0x30] sm:$0xff] %v355
      %358 = vst [vmem:[#allocation4 + $0x38] sm:$0xff] %v356
      %v359 = vld [vmem:[#allocation2 + $0x8] sm:$0xff]
      %v360 = vld [vmem:[#allocation2 + $0x10] sm:$0xff]
      %361 = vst [vmem:[#allocation4 + $0x40] sm:$0xff] %v359
      %362 = vst [vmem:[#allocation4 + $0x48] sm:$0xff] %v360
      %v363 = vld [vmem:[#allocation2 + $0x8] sm:$0xff]
      %v364 = vld [vmem:[#allocation2 + $0x10] sm:$0xff]
      %v365 = vld [vmem:[#allocation2 + $0x18] sm:$0xff]
      %369 = vrot.lane.b32.xlu0 %v363, 127
      %v370 = vpop.permute.xlu0 %369
      %371 = vrot.lane.b32.xlu0 %v364, 127
      %v372 = vpop.permute.xlu0 %371
      %373 = vrot.lane.b32.xlu0 %v365, 127
      %v374 = vpop.permute.xlu0 %373
      %vm375 = vcmask 1039360
      %v376 = vsel %vm375, %v370, %v372
      %v377 = vsel %vm375, %v372, %v374
      %v380 = vsel %vm275, %v376, 0.0
      %v381 = vsel %vm276, %v377, 0.0
      %382 = vst [vmem:[#allocation4 + $0x50] sm:$0xff] %v380
      %383 = vst [vmem:[#allocation4 + $0x58] sm:$0xff] %v381
      %v384 = vld [vmem:[#allocation2 + $0x8] sm:$0xff]
      %v385 = vld [vmem:[#allocation2 + $0x10] sm:$0xff]
      %v386 = vld [vmem:[#allocation2 + $0x18] sm:$0xff]
      %390 = vrot.lane.b32.xlu0 %v384, 113
      %v391 = vpop.permute.xlu0 %390
      %392 = vrot.lane.b32.xlu0 %v385, 113
      %v393 = vpop.permute.xlu0 %392
      %394 = vrot.lane.b32.xlu0 %v386, 113
      %v395 = vpop.permute.xlu0 %394
      %vm396 = vcmask 924672
      %v397 = vsel %vm396, %v391, %v393
      %v398 = vsel %vm396, %v393, %v395
      %v401 = vsel %vm271, %v397, 0.0
      %v402 = vsel %vm272, %v398, 0.0
      %403 = vst [vmem:[#allocation4 + $0x60] sm:$0xff] %v401
      %404 = vst [vmem:[#allocation4 + $0x68] sm:$0xff] %v402
      %v405 = vld [vmem:[#allocation2 + $0x8] sm:$0xff]
      %v406 = vld [vmem:[#allocation2 + $0x10] sm:$0xff]
      %v407 = vld [vmem:[#allocation2 + $0x18] sm:$0xff]
      %411 = vrot.lane.b32.xlu0 %v405, 112
      %v412 = vpop.permute.xlu0 %411
      %413 = vrot.lane.b32.xlu0 %v406, 112
      %v414 = vpop.permute.xlu0 %413
      %415 = vrot.lane.b32.xlu0 %v407, 112
      %v416 = vpop.permute.xlu0 %415
      %vm417 = vcmask 916480
      %v418 = vsel %vm417, %v412, %v414
      %v419 = vsel %vm417, %v414, %v416
      %422 = vst [vmem:[#allocation4 + $0x70] sm:$0xff] %v418
      %423 = vst [vmem:[#allocation4 + $0x78] sm:$0xff] %v419
      %v424 = vld [vmem:[#allocation2 + $0x8] sm:$0xff]
      %v425 = vld [vmem:[#allocation2 + $0x10] sm:$0xff]
      %v426 = vld [vmem:[#allocation2 + $0x18] sm:$0xff]
      %430 = vrot.lane.b32.xlu0 %v424, 111
      %v431 = vpop.permute.xlu0 %430
      %432 = vrot.lane.b32.xlu0 %v425, 111
      %v433 = vpop.permute.xlu0 %432
      %434 = vrot.lane.b32.xlu0 %v426, 111
      %v435 = vpop.permute.xlu0 %434
      %vm436 = vcmask 908288
      %v437 = vsel %vm436, %v431, %v433
      %v438 = vsel %vm436, %v433, %v435
      %v441 = vsel %vm275, %v437, 0.0
      %v442 = vsel %vm276, %v438, 0.0
      %443 = vst [vmem:[#allocation4 + $0x80] sm:$0xff] %v441
      %444 = vst [vmem:[#allocation4 + $0x88] sm:$0xff] %v442
      %v445 = vld [vmem:[#allocation4] sm:$0xff]
      %v446 = vld [vmem:[#allocation4 + $0x8] sm:$0xff]
      %v447 = vld [vmem:[#allocation4 + $0x10] sm:$0xff]
      %v448 = vld [vmem:[#allocation4 + $0x18] sm:$0xff]
      %v449 = vld [vmem:[#allocation4 + $0x20] sm:$0xff]
      %v450 = vld [vmem:[#allocation4 + $0x28] sm:$0xff]
      %v451 = vld [vmem:[#allocation4 + $0x30] sm:$0xff]
      %v452 = vld [vmem:[#allocation4 + $0x38] sm:$0xff]
      %v453 = vld [vmem:[#allocation4 + $0x40] sm:$0xff]
      %v454 = vld [vmem:[#allocation4 + $0x48] sm:$0xff]
      %v455 = vld [vmem:[#allocation4 + $0x50] sm:$0xff]
      %v456 = vld [vmem:[#allocation4 + $0x58] sm:$0xff]
      %v457 = vld [vmem:[#allocation4 + $0x60] sm:$0xff]
      %v458 = vld [vmem:[#allocation4 + $0x68] sm:$0xff]
      %v459 = vld [vmem:[#allocation4 + $0x70] sm:$0xff]
      %v460 = vld [vmem:[#allocation4 + $0x78] sm:$0xff]
      %v461 = vld [vmem:[#allocation4 + $0x80] sm:$0xff]
      %v462 = vld [vmem:[#allocation4 + $0x88] sm:$0xff]
      %v463 = vld [vmem:[%s1] sm:$0xff]
      %v464 = vld [vmem:[%s2] sm:$0xff]
      %466 = vset.pattern.permute.xlu0 0
      %467 = vperm.xlu0 %466, %v464
      %v468 = vpop.permute.xlu0 %467
      %vm470 = vcmask 588800
      %v472 = vsel %vm470, %v463, 0
      %474 = vmatpush.msra.mxu0 0.0
      %475 = vmatpush.msra.mxu0 0.0
      %476 = vmatpush.msra.mxu0 0.0
      %477 = vmatpush.msra.mxu0 0.0
      %478 = vmatpush.msra.mxu0 0.0
      %479 = vmatpush.msra.mxu0 0.0
      %480 = vmatpush.msra.mxu0 0.0
      %481 = vmatpush.msra.mxu0 %v461
      %482 = vmatpush.msra.mxu0 %v459
      %483 = vmatpush.msra.mxu0 %v457
      %484 = vmatpush.msra.mxu0 %v455
      %485 = vmatpush.msra.mxu0 %v453
      %486 = vmatpush.msra.mxu0 %v451
      %487 = vmatpush.msra.mxu0 %v449
      %488 = vmatpush.msra.mxu0 %v447
      %489 = vmatpush.msra.mxu0 %v445
      %490 = vmatmul.f32.gmra.mxu0 %v472
      %v491 = vpop.f32.mrf.mxu0
      %v492 = vadd.f32 %v468, %v491
      %493 = vdwg.mxu0
      %494 = vmatpush.msra.mxu0 0.0
      %495 = vmatpush.msra.mxu0 0.0
      %496 = vmatpush.msra.mxu0 0.0
      %497 = vmatpush.msra.mxu0 0.0
      %498 = vmatpush.msra.mxu0 0.0
      %499 = vmatpush.msra.mxu0 0.0
      %500 = vmatpush.msra.mxu0 0.0
      %501 = vmatpush.msra.mxu0 %v462
      %502 = vmatpush.msra.mxu0 %v460
      %503 = vmatpush.msra.mxu0 %v458
      %504 = vmatpush.msra.mxu0 %v456
      %505 = vmatpush.msra.mxu0 %v454
      %506 = vmatpush.msra.mxu0 %v452
      %507 = vmatpush.msra.mxu0 %v450
      %508 = vmatpush.msra.mxu0 %v448
      %509 = vmatpush.msra.mxu0 %v446
      %510 = vmatmul.f32.gmra.mxu0 %v472
      %v511 = vpop.f32.mrf.mxu0
      %v512 = vadd.f32 %v468, %v511
      %513 = vdwg.mxu0
      %v514 = vmax.f32 %v492, 0.0
      %v515 = vmax.f32 %v512, 0.0
      %516 = vst [vmem:[#allocation3] sm:$0xff] 0.0
      %517 = vst [vmem:[#allocation3 + $0x18] sm:$0xff] 0.0
      %518 = vst [vmem:[#allocation3 + $0x8] sm:$0xff] %v514
      %519 = vst [vmem:[#allocation3 + $0x10] sm:$0xff] %v515
      %v520 = vld [vmem:[#allocation3] sm:$0xff]
      %v521 = vld [vmem:[#allocation3 + $0x8] sm:$0xff]
      %v522 = vld [vmem:[#allocation3 + $0x10] sm:$0xff]
      %526 = vrot.lane.b32.xlu0 %v520, 17
      %v527 = vpop.permute.xlu0 %526
      %528 = vrot.lane.b32.xlu0 %v521, 17
      %v529 = vpop.permute.xlu0 %528
      %530 = vrot.lane.b32.xlu0 %v522, 17
      %v531 = vpop.permute.xlu0 %530
      %v532 = vsel %vm289, %v527, %v529
      %v533 = vsel %vm289, %v529, %v531
      %v536 = vsel %vm271, %v532, 0.0
      %v537 = vsel %vm272, %v533, 0.0
      %538 = vst [vmem:[#allocation5] sm:$0xff] %v536
      %539 = vst [vmem:[#allocation5 + $0x8] sm:$0xff] %v537
      %v540 = vld [vmem:[#allocation3] sm:$0xff]
      %v541 = vld [vmem:[#allocation3 + $0x8] sm:$0xff]
      %v542 = vld [vmem:[#allocation3 + $0x10] sm:$0xff]
      %546 = vrot.lane.b32.xlu0 %v540, 16
      %v547 = vpop.permute.xlu0 %546
      %548 = vrot.lane.b32.xlu0 %v541, 16
      %v549 = vpop.permute.xlu0 %548
      %550 = vrot.lane.b32.xlu0 %v542, 16
      %v551 = vpop.permute.xlu0 %550
      %v552 = vsel %vm310, %v547, %v549
      %v553 = vsel %vm310, %v549, %v551
      %556 = vst [vmem:[#allocation5 + $0x10] sm:$0xff] %v552
      %557 = vst [vmem:[#allocation5 + $0x18] sm:$0xff] %v553
      %v558 = vld [vmem:[#allocation3] sm:$0xff]
      %v559 = vld [vmem:[#allocation3 + $0x8] sm:$0xff]
      %v560 = vld [vmem:[#allocation3 + $0x10] sm:$0xff]
      %564 = vrot.lane.b32.xlu0 %v558, 15
      %v565 = vpop.permute.xlu0 %564
      %566 = vrot.lane.b32.xlu0 %v559, 15
      %v567 = vpop.permute.xlu0 %566
      %568 = vrot.lane.b32.xlu0 %v560, 15
      %v569 = vpop.permute.xlu0 %568
      %v570 = vsel %vm329, %v565, %v567
      %v571 = vsel %vm329, %v567, %v569
      %v574 = vsel %vm275, %v570, 0.0
      %v575 = vsel %vm276, %v571, 0.0
      %576 = vst [vmem:[#allocation5 + $0x20] sm:$0xff] %v574
      %577 = vst [vmem:[#allocation5 + $0x28] sm:$0xff] %v575
      %v578 = vld [vmem:[#allocation3] sm:$0xff]
      %v579 = vld [vmem:[#allocation3 + $0x8] sm:$0xff]
      %v580 = vld [vmem:[#allocation3 + $0x10] sm:$0xff]
      %584 = vrot.lane.b32.xlu0 %v578, 1
      %v585 = vpop.permute.xlu0 %584
      %586 = vrot.lane.b32.xlu0 %v579, 1
      %v587 = vpop.permute.xlu0 %586
      %588 = vrot.lane.b32.xlu0 %v580, 1
      %v589 = vpop.permute.xlu0 %588
      %v590 = vsel %vm350, %v585, %v587
      %v591 = vsel %vm350, %v587, %v589
      %v594 = vsel %vm271, %v590, 0.0
      %v595 = vsel %vm272, %v591, 0.0
      %596 = vst [vmem:[#allocation5 + $0x30] sm:$0xff] %v594
      %597 = vst [vmem:[#allocation5 + $0x38] sm:$0xff] %v595
      %598 = vst [vmem:[#allocation5 + $0x40] sm:$0xff] %v514
      %599 = vst [vmem:[#allocation5 + $0x48] sm:$0xff] %v515
      %v600 = vld [vmem:[#allocation3 + $0x8] sm:$0xff]
      %v601 = vld [vmem:[#allocation3 + $0x10] sm:$0xff]
      %v602 = vld [vmem:[#allocation3 + $0x18] sm:$0xff]
      %606 = vrot.lane.b32.xlu0 %v600, 127
      %v607 = vpop.permute.xlu0 %606
      %608 = vrot.lane.b32.xlu0 %v601, 127
      %v609 = vpop.permute.xlu0 %608
      %610 = vrot.lane.b32.xlu0 %v602, 127
      %v611 = vpop.permute.xlu0 %610
      %v612 = vsel %vm375, %v607, %v609
      %v613 = vsel %vm375, %v609, %v611
      %v616 = vsel %vm275, %v612, 0.0
      %v617 = vsel %vm276, %v613, 0.0
      %618 = vst [vmem:[#allocation5 + $0x50] sm:$0xff] %v616
      %619 = vst [vmem:[#allocation5 + $0x58] sm:$0xff] %v617
      %v620 = vld [vmem:[#allocation3 + $0x8] sm:$0xff]
      %v621 = vld [vmem:[#allocation3 + $0x10] sm:$0xff]
      %v622 = vld [vmem:[#allocation3 + $0x18] sm:$0xff]
      %626 = vrot.lane.b32.xlu0 %v620, 113
      %v627 = vpop.permute.xlu0 %626
      %628 = vrot.lane.b32.xlu0 %v621, 113
      %v629 = vpop.permute.xlu0 %628
      %630 = vrot.lane.b32.xlu0 %v622, 113
      %v631 = vpop.permute.xlu0 %630
      %v632 = vsel %vm396, %v627, %v629
      %v633 = vsel %vm396, %v629, %v631
      %v636 = vsel %vm271, %v632, 0.0
      %v637 = vsel %vm272, %v633, 0.0
      %638 = vst [vmem:[#allocation5 + $0x60] sm:$0xff] %v636
      %639 = vst [vmem:[#allocation5 + $0x68] sm:$0xff] %v637
      %v640 = vld [vmem:[#allocation3 + $0x8] sm:$0xff]
      %v641 = vld [vmem:[#allocation3 + $0x10] sm:$0xff]
      %v642 = vld [vmem:[#allocation3 + $0x18] sm:$0xff]
      %646 = vrot.lane.b32.xlu0 %v640, 112
      %v647 = vpop.permute.xlu0 %646
      %648 = vrot.lane.b32.xlu0 %v641, 112
      %v649 = vpop.permute.xlu0 %648
      %650 = vrot.lane.b32.xlu0 %v642, 112
      %v651 = vpop.permute.xlu0 %650
      %v652 = vsel %vm417, %v647, %v649
      %v653 = vsel %vm417, %v649, %v651
      %656 = vst [vmem:[#allocation5 + $0x70] sm:$0xff] %v652
      %657 = vst [vmem:[#allocation5 + $0x78] sm:$0xff] %v653
      %v658 = vld [vmem:[#allocation3 + $0x8] sm:$0xff]
      %v659 = vld [vmem:[#allocation3 + $0x10] sm:$0xff]
      %v660 = vld [vmem:[#allocation3 + $0x18] sm:$0xff]
      %664 = vrot.lane.b32.xlu0 %v658, 111
      %v665 = vpop.permute.xlu0 %664
      %666 = vrot.lane.b32.xlu0 %v659, 111
      %v667 = vpop.permute.xlu0 %666
      %668 = vrot.lane.b32.xlu0 %v660, 111
      %v669 = vpop.permute.xlu0 %668
      %v670 = vsel %vm436, %v665, %v667
      %v671 = vsel %vm436, %v667, %v669
      %v674 = vsel %vm275, %v670, 0.0
      %v675 = vsel %vm276, %v671, 0.0
      %676 = vst [vmem:[#allocation5 + $0x80] sm:$0xff] %v674
      %677 = vst [vmem:[#allocation5 + $0x88] sm:$0xff] %v675
      %v678 = vld [vmem:[#allocation5] sm:$0xff]
      %v679 = vld [vmem:[#allocation5 + $0x8] sm:$0xff]
      %v680 = vld [vmem:[#allocation5 + $0x10] sm:$0xff]
      %v681 = vld [vmem:[#allocation5 + $0x18] sm:$0xff]
      %v682 = vld [vmem:[#allocation5 + $0x20] sm:$0xff]
      %v683 = vld [vmem:[#allocation5 + $0x28] sm:$0xff]
      %v684 = vld [vmem:[#allocation5 + $0x30] sm:$0xff]
      %v685 = vld [vmem:[#allocation5 + $0x38] sm:$0xff]
      %v686 = vld [vmem:[#allocation5 + $0x40] sm:$0xff]
      %v687 = vld [vmem:[#allocation5 + $0x48] sm:$0xff]
      %v688 = vld [vmem:[#allocation5 + $0x50] sm:$0xff]
      %v689 = vld [vmem:[#allocation5 + $0x58] sm:$0xff]
      %v690 = vld [vmem:[#allocation5 + $0x60] sm:$0xff]
      %v691 = vld [vmem:[#allocation5 + $0x68] sm:$0xff]
      %v692 = vld [vmem:[#allocation5 + $0x70] sm:$0xff]
      %v693 = vld [vmem:[#allocation5 + $0x78] sm:$0xff]
      %v694 = vld [vmem:[#allocation5 + $0x80] sm:$0xff]
      %v695 = vld [vmem:[#allocation5 + $0x88] sm:$0xff]
      %v696 = vld [vmem:[%s3] sm:$0xff]
      %v697 = vld [vmem:[%s4] sm:$0xff]
      %699 = vset.pattern.permute.xlu0 0
      %700 = vperm.xlu0 %699, %v697
      %v701 = vpop.permute.xlu0 %700
      %v704 = vsel %vm470, %v696, 0
      %706 = vmatpush.msra.mxu0 0.0
      %707 = vmatpush.msra.mxu0 0.0
      %708 = vmatpush.msra.mxu0 0.0
      %709 = vmatpush.msra.mxu0 0.0
      %710 = vmatpush.msra.mxu0 0.0
      %711 = vmatpush.msra.mxu0 0.0
      %712 = vmatpush.msra.mxu0 0.0
      %713 = vmatpush.msra.mxu0 %v694
      %714 = vmatpush.msra.mxu0 %v692
      %715 = vmatpush.msra.mxu0 %v690
      %716 = vmatpush.msra.mxu0 %v688
      %717 = vmatpush.msra.mxu0 %v686
      %718 = vmatpush.msra.mxu0 %v684
      %719 = vmatpush.msra.mxu0 %v682
      %720 = vmatpush.msra.mxu0 %v680
      %721 = vmatpush.msra.mxu0 %v678
      %722 = vmatmul.f32.gmra.mxu0 %v704
      %v723 = vpop.f32.mrf.mxu0
      %v724 = vadd.f32 %v701, %v723
      %725 = vdwg.mxu0
      %726 = vmatpush.msra.mxu0 0.0
      %727 = vmatpush.msra.mxu0 0.0
      %728 = vmatpush.msra.mxu0 0.0
      %729 = vmatpush.msra.mxu0 0.0
      %730 = vmatpush.msra.mxu0 0.0
      %731 = vmatpush.msra.mxu0 0.0
      %732 = vmatpush.msra.mxu0 0.0
      %733 = vmatpush.msra.mxu0 %v695
      %734 = vmatpush.msra.mxu0 %v693
      %735 = vmatpush.msra.mxu0 %v691
      %736 = vmatpush.msra.mxu0 %v689
      %737 = vmatpush.msra.mxu0 %v687
      %738 = vmatpush.msra.mxu0 %v685
      %739 = vmatpush.msra.mxu0 %v683
      %740 = vmatpush.msra.mxu0 %v681
      %741 = vmatpush.msra.mxu0 %v679
      %742 = vmatmul.f32.gmra.mxu0 %v704
      %v743 = vpop.f32.mrf.mxu0
      %v744 = vadd.f32 %v701, %v743
      %745 = vdwg.mxu0
      %v746 = vmax.f32 %v724, 0.0
      %v747 = vmax.f32 %v744, 0.0
      %748 = vst [vmem:[%s224] sm:$0xff] %v746
      %749 = vst [vmem:[%s224 + $0x8] sm:$0xff] %v747
      %p750 = scmp.lt.s32.totalorder %s16, 1
      %s751 = scalar_select %p750, %s16, 1
      %s752 = smul.addr %s751, 2
      %s753 = smul.addr %s752, 8
      %s754 = scalar_lea.vmem %s5, %s753
      // Predicated region
      $region41: #{double_conv2_forward.1} parent=39 // pred_check
        %p755 = pneg %p144
      $region42: #{double_conv2_forward.1} parent=39 // pred_check_branch
        %757 = sbr.rel (%p755) target = $region44
      $region43: #{double_conv2_forward.1} parent=39 // pred_region
        _
      $region44: #{double_conv2_forward.1} parent=39 // pred_fallthru
        _
    $region40: #{double_conv2_forward.1} parent=5 // pred_fallthru
      _
    %p758 = scmp.le.s32.totalorder 2, %s11
    // Predicated region
    $region45: #{double_conv2_forward.1} parent=5 // pred_check
      %p759 = pneg %p758
    $region46: #{double_conv2_forward.1} parent=5 // pred_check_branch
      %761 = sbr.rel (%p759) target = $region48
    $region47: #{double_conv2_forward.1} parent=5 // pred_region
      %s762 = ssub.s32 %s11, 2
      // Predicated region
      $region49: #{double_conv2_forward.1} parent=47 // pred_check
        %p763 = pneg %p150
      $region50: #{double_conv2_forward.1} parent=47 // pred_check_branch
        %765 = sbr.rel (%p763) target = $region52
      $region51: #{double_conv2_forward.1} parent=47 // pred_region
        %p766 = scmp.lt.s32.totalorder %s17, 1
        %s767 = scalar_select %p766, %s17, 1
        %s768 = smul.addr %s767, 2
        %s769 = smul.addr %s768, 8
        %s770 = scalar_lea.vmem %s5, %s769
      $region52: #{double_conv2_forward.1} parent=47 // pred_fallthru
        _
    $region48: #{double_conv2_forward.1} parent=5 // pred_fallthru
      _
  $region6: #{double_conv2_forward.1} parent=0 // loop_footer
    %s15 = sadd.s32 1, %s11
  $region7: #{double_conv2_forward.1} parent=0 // loop_footer_branch
    %10 = sbr.rel target = $region3
  $region8: #{double_conv2_forward.1} parent=0 // loop_exit
    _

</llo_original>
